<compile_context>
chip_gen: v7x
topology: tpu7x:2x2x1
jax: 0.10.0
libtpu: 0.0.40
codegen_flags: <defaults>
</compile_context>

<pallas_src>
import functools

import jax
import jax.numpy as jnp
from jax.experimental import pallas as pl
from jax.experimental.pallas import tpu as pltpu


def _round_up(a: int, b: int) -> int:
    return -(-a // b) * b


def full3net_kernel(x_ref, w1_ref, b1_ref, w2_ref, b2_ref, w3_ref, b3_ref, o_ref,
                    *, compute_dtype):
    # x_ref : (2, TN)      batch on lanes
    # w1_ref: (hid, 2)     torch layout (out_features, in_features)
    # b1_ref: (hid, 1)
    # w2_ref: (hid, hid)
    # b2_ref: (hid, 1)
    # w3_ref: (hid, 1)     torch (1, hid) stored transposed
    # b3_ref: (1, 1)
    # o_ref : (1, TN)      lane-dense output
    x = x_ref[...]
    w1 = w1_ref[...]

    # Layer 1: K=2 is degenerate for the MXU -> two VPU broadcast mul-adds.
    pre1 = w1[:, 0:1] * x[0:1, :] + w1[:, 1:2] * x[1:2, :] + b1_ref[...]
    h1 = jnp.tanh(pre1.astype(compute_dtype))                       # (hid, TN)

    # Layer 2: the only real matmul -> MXU, f32 accumulation.
    w2 = w2_ref[...].astype(compute_dtype)
    pre2 = jnp.dot(w2, h1, preferred_element_type=jnp.float32) + b2_ref[...]
    h2 = jnp.tanh(pre2.astype(compute_dtype))                       # (hid, TN)

    # Layer 3: output width 1 -> lane-parallel multiply + sublane reduce (skip MXU).
    # (f32*bf16 promotes to f32, so the reduction accumulates in f32.)
    z = jnp.sum(w3_ref[...] * h2, axis=0, keepdims=True) + b3_ref[...]   # (1, TN)

    # sigmoid(z) == 0.5 * (1 + tanh(z/2)): one EUP op, keeps the EUP pipeline uniform.
    o_ref[...] = (0.5 * (1.0 + jnp.tanh(0.5 * z))).astype(o_ref.dtype)


def full3net_forward_t(xt, w1, b1, w2, b2, w3, b3, *,
                       tile_n=8192, compute_dtype=jnp.float32):
    """Preferred entry point: xt is (2, N) float32 (batch on the trailing axis),
    so no transpose/pad pass over x is needed. Returns (1, N) float32."""
    n = int(xt.shape[1])
    hid = int(w1.shape[0])

    # Batch tile: always a multiple of 128 lanes (lane-128 rule), capped at tile_n.
    # At the default tile_n=8192 / hid=32 the per-step VMEM footprint is ~5 MB
    # (4 temps of hid*TN*4 B + double-buffered x/out tiles), well under the 16 MiB
    # default scoped VMEM of v5e, so no vmem_limit_bytes override is needed.
    tile_n = max(128, _round_up(tile_n, 128))
    tn = min(tile_n, _round_up(n, 128))
    if n > 128:
        # Keep at least 2 grid steps so "parallel" can shard across v7x's 2 TCs.
        tn = min(tn, max(128, _round_up(pl.cdiv(n, 2), 128)))
    grid = (pl.cdiv(n, tn),)

    # Advisory cost hint so XLA overlaps the surrounding ops instead of assuming
    # a zero-cost custom call.
    flops = 2 * n * hid * (hid + 3)
    transcendentals = n * (2 * hid + 1)
    bytes_accessed = 12 * n + 4 * (hid * hid + 4 * hid + 2)

    grid_spec = pltpu.PrefetchScalarGridSpec(
        num_scalar_prefetch=0,
        grid=grid,
        in_specs=[
            pl.BlockSpec((2, tn), lambda i: (0, i)),        # x tile (batch on lanes)
            pl.BlockSpec((hid, 2), lambda i: (0, 0)),       # weights: VMEM-resident
            pl.BlockSpec((hid, 1), lambda i: (0, 0)),
            pl.BlockSpec((hid, hid), lambda i: (0, 0)),
            pl.BlockSpec((hid, 1), lambda i: (0, 0)),
            pl.BlockSpec((hid, 1), lambda i: (0, 0)),
            pl.BlockSpec((1, 1), lambda i: (0, 0)),
        ],
        out_specs=pl.BlockSpec((1, tn), lambda i: (0, i)),  # lane-dense output
    )

    kernel = functools.partial(full3net_kernel, compute_dtype=compute_dtype)

    out_t = pl.pallas_call(
        kernel,
        out_shape=jax.ShapeDtypeStruct((1, n), jnp.float32),
        grid_spec=grid_spec,
        compiler_params=pltpu.CompilerParams(
            dimension_semantics=("parallel",),   # shards batch across 2 TCs on v7x
        ),
        cost_estimate=pl.CostEstimate(
            flops=flops,
            transcendentals=transcendentals,
            bytes_accessed=bytes_accessed,
        ),
    )(xt, w1, b1, w2, b2, w3, b3)
    return out_t


def full3net_forward(x, w1, b1, w2, b2, w3, b3, *,
                     tile_n=8192, compute_dtype=jnp.float32):
    """Torch-compatible entry point: x is (N, 2) float32, returns (N, 1) float32.
    Does a single x.T pass; producers that can emit (2, N) directly should call
    full3net_forward_t to avoid it."""
    n = int(x.shape[0])
    out_t = full3net_forward_t(x.T, w1, b1, w2, b2, w3, b3,
                               tile_n=tile_n, compute_dtype=compute_dtype)
    # (1, N) -> (N, 1): same contiguous data, free reshape.
    return out_t.reshape(n, 1)


def init_params(key, hid):
    # Mimic torch.nn.Linear default init: U(-1/sqrt(fan_in), +1/sqrt(fan_in)).
    ks = jax.random.split(key, 6)

    def uni(k, shape, fan_in):
        bound = 1.0 / jnp.sqrt(jnp.float32(fan_in))
        return jax.random.uniform(k, shape, jnp.float32, -bound, bound)

    w1 = uni(ks[0], (hid, 2), 2)        # (out, in) — torch layout
    b1 = uni(ks[1], (hid, 1), 2)        # kept 2D, lane-broadcastable
    w2 = uni(ks[2], (hid, hid), hid)    # (out, in)
    b2 = uni(ks[3], (hid, 1), hid)
    w3 = uni(ks[4], (hid, 1), hid)      # torch (1, hid) stored transposed
    b3 = uni(ks[5], (1, 1), hid)
    return w1, b1, w2, b2, w3, b3


def reference_forward(x, w1, b1, w2, b2, w3, b3):
    # Plain-JAX reference in the conventional (batch, feature) layout.
    h1 = jnp.tanh(x @ w1.T + b1.T)
    h2 = jnp.tanh(h1 @ w2.T + b2.T)
    return jax.nn.sigmoid(h2 @ w3 + b3)


if __name__ == "__main__":
    key = jax.random.PRNGKey(0)
    k_x, k_p = jax.random.split(key)

    batch, hid = 300, 32                 # non-multiple of 128 -> exercises the
    x = jax.random.normal(k_x, (batch, 2), dtype=jnp.float32)   # boundary block
    params = init_params(k_p, hid)

    ref = reference_forward(x, *params)

    # Default f32 path. With batch=300 the wrapper picks tn=256 -> grid=(2,),
    # so the multi-step grid + ragged last block are both exercised.
    out = full3net_forward(x, *params)
    out = jax.block_until_ready(out)
    assert out.shape == (batch, 1)
    assert jnp.allclose(out, ref, atol=2e-5, rtol=2e-5)

    # bf16 EUP/MXU path (the v6e/v7x optimization); loose tolerance by design.
    out_bf16 = full3net_forward(x, *params, compute_dtype=jnp.bfloat16)
    out_bf16 = jax.block_until_ready(out_bf16)
    assert jnp.allclose(out_bf16, ref, atol=5e-2, rtol=0.0)

    print("KERNEL_OK")
</pallas_src>

<mosaic_0001>
module attributes {stable_mosaic.version = 11 : i64} {
  func.func @full3net_kernel(%arg0: i32, %arg1: memref<2x256xf32, #tpu.memory_space<vmem>>, %arg2: memref<32x2xf32, #tpu.memory_space<vmem>>, %arg3: memref<32x1xf32, #tpu.memory_space<vmem>>, %arg4: memref<32x32xf32, #tpu.memory_space<vmem>>, %arg5: memref<32x1xf32, #tpu.memory_space<vmem>>, %arg6: memref<32x1xf32, #tpu.memory_space<vmem>>, %arg7: memref<1x1xf32, #tpu.memory_space<vmem>>, %arg8: memref<1x256xf32, #tpu.memory_space<vmem>>) attributes {dimension_semantics = [#tpu.dimension_semantics<parallel>], iteration_bounds = array<i64: 2>, scalar_prefetch = 0 : i64, scratch_operands = 0 : i64, tpu.core_type = #tpu.core_type<tc>, window_params = [{transform_indices = @transform_0, window_bounds = array<i64: 2, 256>}, {pipeline_mode = #tpu.pipeline_mode<synchronous>, transform_indices = @transform_1, window_bounds = array<i64: 32, 2>}, {pipeline_mode = #tpu.pipeline_mode<synchronous>, transform_indices = @transform_2, window_bounds = array<i64: 32, 1>}, {pipeline_mode = #tpu.pipeline_mode<synchronous>, transform_indices = @transform_3, window_bounds = array<i64: 32, 32>}, {pipeline_mode = #tpu.pipeline_mode<synchronous>, transform_indices = @transform_4, window_bounds = array<i64: 32, 1>}, {pipeline_mode = #tpu.pipeline_mode<synchronous>, transform_indices = @transform_5, window_bounds = array<i64: 32, 1>}, {pipeline_mode = #tpu.pipeline_mode<synchronous>, transform_indices = @transform_6, window_bounds = array<i64: 1, 1>}, {transform_indices = @transform_7, window_bounds = array<i64: 1, 256>}]} {
    %c0 = arith.constant 0 : index
    %c0_0 = arith.constant 0 : index
    %0 = vector.load %arg1[%c0, %c0_0] : memref<2x256xf32, #tpu.memory_space<vmem>>, vector<2x256xf32>
    %c0_1 = arith.constant 0 : index
    %c0_2 = arith.constant 0 : index
    %1 = vector.load %arg2[%c0_1, %c0_2] : memref<32x2xf32, #tpu.memory_space<vmem>>, vector<32x2xf32>
    %2 = vector.extract_strided_slice %1 {offsets = [0, 0], sizes = [32, 1], strides = [1, 1]} : vector<32x2xf32> to vector<32x1xf32>
    %3 = vector.extract_strided_slice %0 {offsets = [0, 0], sizes = [1, 256], strides = [1, 1]} : vector<2x256xf32> to vector<1x256xf32>
    %4 = vector.broadcast %2 : vector<32x1xf32> to vector<32x256xf32>
    %5 = vector.broadcast %3 : vector<1x256xf32> to vector<32x256xf32>
    %6 = arith.mulf %4, %5 : vector<32x256xf32>
    %7 = vector.extract_strided_slice %1 {offsets = [0, 1], sizes = [32, 1], strides = [1, 1]} : vector<32x2xf32> to vector<32x1xf32>
    %8 = vector.extract_strided_slice %0 {offsets = [1, 0], sizes = [1, 256], strides = [1, 1]} : vector<2x256xf32> to vector<1x256xf32>
    %9 = vector.broadcast %7 : vector<32x1xf32> to vector<32x256xf32>
    %10 = vector.broadcast %8 : vector<1x256xf32> to vector<32x256xf32>
    %11 = arith.mulf %9, %10 : vector<32x256xf32>
    %12 = arith.addf %6, %11 : vector<32x256xf32>
    %c0_3 = arith.constant 0 : index
    %c0_4 = arith.constant 0 : index
    %13 = vector.load %arg3[%c0_3, %c0_4] : memref<32x1xf32, #tpu.memory_space<vmem>>, vector<32x1xf32>
    %14 = vector.broadcast %13 : vector<32x1xf32> to vector<32x256xf32>
    %15 = arith.addf %12, %14 : vector<32x256xf32>
    %16 = math.tanh %15 : vector<32x256xf32>
    %c0_5 = arith.constant 0 : index
    %c0_6 = arith.constant 0 : index
    %17 = vector.load %arg4[%c0_5, %c0_6] : memref<32x32xf32, #tpu.memory_space<vmem>>, vector<32x32xf32>
    %cst = arith.constant dense<0.000000e+00> : vector<32x256xf32>
    %18 = tpu.matmul %17, %16, %cst {dimension_numbers = #tpu.dot_dimension_numbers<[1], [0], [0], [1], [0, 0, 1, 1], [], []>} : vector<32x32xf32>, vector<32x256xf32>, vector<32x256xf32> -> vector<32x256xf32>
    %c0_7 = arith.constant 0 : index
    %c0_8 = arith.constant 0 : index
    %19 = vector.load %arg5[%c0_7, %c0_8] : memref<32x1xf32, #tpu.memory_space<vmem>>, vector<32x1xf32>
    %20 = vector.broadcast %19 : vector<32x1xf32> to vector<32x256xf32>
    %21 = arith.addf %18, %20 : vector<32x256xf32>
    %22 = math.tanh %21 : vector<32x256xf32>
    %c0_9 = arith.constant 0 : index
    %c0_10 = arith.constant 0 : index
    %23 = vector.load %arg6[%c0_9, %c0_10] : memref<32x1xf32, #tpu.memory_space<vmem>>, vector<32x1xf32>
    %24 = vector.broadcast %23 : vector<32x1xf32> to vector<32x256xf32>
    %25 = arith.mulf %24, %22 : vector<32x256xf32>
    %cst_11 = arith.constant dense<0.000000e+00> : vector<256xf32>
    %26 = vector.multi_reduction <add>, %25, %cst_11 [0] : vector<32x256xf32> to vector<256xf32>
    %27 = vector.shape_cast %26 : vector<256xf32> to vector<1x256xf32>
    %c0_12 = arith.constant 0 : index
    %c0_13 = arith.constant 0 : index
    %28 = vector.load %arg7[%c0_12, %c0_13] : memref<1x1xf32, #tpu.memory_space<vmem>>, vector<1x1xf32>
    %29 = vector.broadcast %28 : vector<1x1xf32> to vector<1x256xf32>
    %30 = arith.addf %27, %29 : vector<1x256xf32>
    %cst_14 = arith.constant 5.000000e-01 : f32
    %31 = vector.broadcast %cst_14 : f32 to vector<1x256xf32>
    %32 = arith.mulf %31, %30 : vector<1x256xf32>
    %33 = math.tanh %32 : vector<1x256xf32>
    %cst_15 = arith.constant 1.000000e+00 : f32
    %34 = vector.broadcast %cst_15 : f32 to vector<1x256xf32>
    %35 = arith.addf %34, %33 : vector<1x256xf32>
    %cst_16 = arith.constant 5.000000e-01 : f32
    %36 = vector.broadcast %cst_16 : f32 to vector<1x256xf32>
    %37 = arith.mulf %36, %35 : vector<1x256xf32>
    %c0_17 = arith.constant 0 : index
    %c0_18 = arith.constant 0 : index
    %38 = vector.load %arg8[%c0_17, %c0_18] : memref<1x256xf32, #tpu.memory_space<vmem>>, vector<1x256xf32>
    tpu.vector_store %arg8[%c0_17, %c0_18], %37 {strides = array<i32>} : memref<1x256xf32, #tpu.memory_space<vmem>>, vector<1x256xf32>,
    return
  }
  func.func @transform_0(%arg0: i32) -> (i32, i32) {
    %c0_i32 = arith.constant 0 : i32
    %c0_i32_0 = arith.constant 0 : i32
    return %c0_i32, %arg0 : i32, i32
  }
  func.func @transform_1(%arg0: i32) -> (i32, i32) {
    %c0_i32 = arith.constant 0 : i32
    %c0_i32_0 = arith.constant 0 : i32
    %c0_i32_1 = arith.constant 0 : i32
    return %c0_i32, %c0_i32_0 : i32, i32
  }
  func.func @transform_2(%arg0: i32) -> (i32, i32) {
    %c0_i32 = arith.constant 0 : i32
    %c0_i32_0 = arith.constant 0 : i32
    %c0_i32_1 = arith.constant 0 : i32
    return %c0_i32, %c0_i32_0 : i32, i32
  }
  func.func @transform_3(%arg0: i32) -> (i32, i32) {
    %c0_i32 = arith.constant 0 : i32
    %c0_i32_0 = arith.constant 0 : i32
    %c0_i32_1 = arith.constant 0 : i32
    return %c0_i32, %c0_i32_0 : i32, i32
  }
  func.func @transform_4(%arg0: i32) -> (i32, i32) {
    %c0_i32 = arith.constant 0 : i32
    %c0_i32_0 = arith.constant 0 : i32
    %c0_i32_1 = arith.constant 0 : i32
    return %c0_i32, %c0_i32_0 : i32, i32
  }
  func.func @transform_5(%arg0: i32) -> (i32, i32) {
    %c0_i32 = arith.constant 0 : i32
    %c0_i32_0 = arith.constant 0 : i32
    %c0_i32_1 = arith.constant 0 : i32
    return %c0_i32, %c0_i32_0 : i32, i32
  }
  func.func @transform_6(%arg0: i32) -> (i32, i32) {
    %c0_i32 = arith.constant 0 : i32
    %c0_i32_0 = arith.constant 0 : i32
    %c0_i32_1 = arith.constant 0 : i32
    return %c0_i32, %c0_i32_0 : i32, i32
  }
  func.func @transform_7(%arg0: i32) -> (i32, i32) {
    %c0_i32 = arith.constant 0 : i32
    %c0_i32_0 = arith.constant 0 : i32
    return %c0_i32, %arg0 : i32, i32
  }
}

</mosaic_0001>

<llo_original>
// kernel: tpu_custom_call.1
$region0: #{tpu_custom_call.1}
  #allocation0 [shape = 'u32[]', space=smem, size = 0x4, offset = 0x4, fixed_abs, tag = 'smem constant byte address 0x4 - core index']
  #allocation1 [shape = 'u32[144,128]{1,0:T(1,128)}', space=vmem, size = 0x12000, scoped, tag = 'internal scratch']
  #allocation2 [shape = 'f32[1,1]{1,0:T(1,128)S(1)}', space=vmem, size = 0x200, scoped, tag = 'scoped memory for tpu_custom_call.1']
  %s0 = inlined_call_operand.vmem [shape: f32[2,300], index: 0, kind: input, shape index: {}]
  %s1 = inlined_call_operand.vmem [shape: f32[32,2], index: 1, kind: input, shape index: {}]
  %s2 = inlined_call_operand.vmem [shape: f32[32,1], index: 2, kind: input, shape index: {}]
  %s3 = inlined_call_operand.vmem [shape: f32[32,32], index: 3, kind: input, shape index: {}]
  %s4 = inlined_call_operand.vmem [shape: f32[32,1], index: 4, kind: input, shape index: {}]
  %s5 = inlined_call_operand.vmem [shape: f32[32,1], index: 5, kind: input, shape index: {}]
  %s6 = inlined_call_operand.<no memory space> [shape: f32[1,1], index: 6, kind: input, shape index: {}]
  %s7 = inlined_call_operand.hbm [shape: f32[1,300], index: 7, kind: output, shape index: {}]
  %s8 = sld [smem:[#allocation0]]
  $region61: #{tpu_custom_call.1} parent=0
    _
  %s10 = ssub.s32 1, %s8
  %s11 = scalar_select 0, %s10, %s8
  %v12 = vstv %s6
  %13 = vst [vmem:[#allocation2] sm:$0x1] %v12
  $region1: #{tpu_custom_call.1} parent=0
    #allocation3 [shape = 'u8[2048]{0}', space=vmem, size = 0x800, scoped, tag = 'output window, operand 0']
    #allocation4 [shape = 's32[2]{0}', space=sflag, size = 0x8, scoped, tag = 'scoped memory for tpu_custom_call.1']
    %14 = vsyncpa [#allocation4], 0
    %s15 = scalar_lea.sflag [#allocation4], 1
    %16 = vsyncpa %s15, 0
    loop: start=0, step=1, limit=4
    $region2: #{tpu_custom_call.1} parent=1 // loop_pre_header
      _
    $region3: #{tpu_custom_call.1} parent=1 // loop_header
      %s18 = sphi 0, %s22
      %p19 = scmp.ge.s32.totalorder %s18, 4
      %s28 = sphi 0, %s30
      %s31 = sphi 0, %s28
      %s32 = sphi 0, %s31
      %s48 = sphi 0, %s32
      %s52 = sphi 0, %s52
      %s54 = sphi 0, %s52
      %s55 = sphi 0, %s54
      %s69 = sphi 0, %s55
      %s73 = sphi 0, %s73
      %s75 = sphi 0, %s73
      %s76 = sphi 0, %s75
      %s90 = sphi 0, %s76
      %s94 = sphi 0, %s94
      %s96 = sphi 0, %s94
      %s97 = sphi 0, %s96
      %s111 = sphi 0, %s97
      %s115 = sphi 0, %s115
      %s117 = sphi 0, %s115
      %s118 = sphi 0, %s117
      %s132 = sphi 0, %s118
      %s136 = sphi 0, %s136
      %s138 = sphi 0, %s136
      %s139 = sphi 0, %s138
      %s153 = sphi 0, %s139
      %s157 = sphi 0, %s157
      %s159 = sphi 0, %s157
      %s160 = sphi 0, %s159
      %s174 = sphi 0, %s160
      %s180 = sphi 0, %s182
      %s183 = sphi 0, %s180
      %s184 = sphi 0, %s183
      %s200 = sphi 0, %s184
    $region4: #{tpu_custom_call.1} parent=1 // loop_header_branch
      %21 = sbr.rel (%p19) target = $region8
    $region5: #{tpu_custom_call.1} parent=1 // loop_body
      %s23 = ssub.s32 %s18, 1
      %s24 = ssub.s32 %s18, 2
      %s25 = sadd.s32 %s18, 1
      %s26 = ssub.s32 %s18, %s25
      %p27 = scmp.eq.s32.totalorder %s26, 0
      %s29 = sadd.s32 %s28, 1
      %s30 = scalar_select %p27, %s28, %s29
      %p33 = pneg %p27
      %p34 = scmp.eq.s32.totalorder %s18, 1
      %p35 = por %p33, %p34
      %p36 = scmp.ne.s32.totalorder %s28, %s31
      %p37 = scmp.eq.s32.totalorder %s18, 0
      %p38 = por %p36, %p37
      %p39 = scmp.ne.s32.totalorder %s28, %s31
      %p40 = scmp.eq.s32.totalorder %s23, 1
      %p41 = por %p39, %p40
      %p42 = scmp.ne.s32.totalorder %s31, %s32
      %p43 = scmp.eq.s32.totalorder %s23, 0
      %p44 = por %p42, %p43
      %p45 = scmp.ne.s32.totalorder %s31, %s32
      %p46 = scmp.eq.s32.totalorder %s24, 1
      %p47 = por %p45, %p46
      %p49 = scmp.ne.s32.totalorder %s32, %s48
      %p50 = scmp.eq.s32.totalorder %s24, 0
      %p51 = por %p49, %p50
      %s53 = sadd.s32 %s52, 1
      %p56 = scmp.eq.s32.totalorder %s18, 1
      %p57 = scmp.ne.s32.totalorder %s52, %s54
      %p58 = scmp.eq.s32.totalorder %s18, 0
      %p59 = por %p57, %p58
      %p60 = scmp.ne.s32.totalorder %s52, %s54
      %p61 = scmp.eq.s32.totalorder %s23, 1
      %p62 = por %p60, %p61
      %p63 = scmp.ne.s32.totalorder %s54, %s55
      %p64 = scmp.eq.s32.totalorder %s23, 0
      %p65 = por %p63, %p64
      %p66 = scmp.ne.s32.totalorder %s54, %s55
      %p67 = scmp.eq.s32.totalorder %s24, 1
      %p68 = por %p66, %p67
      %p70 = scmp.ne.s32.totalorder %s55, %s69
      %p71 = scmp.eq.s32.totalorder %s24, 0
      %p72 = por %p70, %p71
      %s74 = sadd.s32 %s73, 1
      %p77 = scmp.eq.s32.totalorder %s18, 1
      %p78 = scmp.ne.s32.totalorder %s73, %s75
      %p79 = scmp.eq.s32.totalorder %s18, 0
      %p80 = por %p78, %p79
      %p81 = scmp.ne.s32.totalorder %s73, %s75
      %p82 = scmp.eq.s32.totalorder %s23, 1
      %p83 = por %p81, %p82
      %p84 = scmp.ne.s32.totalorder %s75, %s76
      %p85 = scmp.eq.s32.totalorder %s23, 0
      %p86 = por %p84, %p85
      %p87 = scmp.ne.s32.totalorder %s75, %s76
      %p88 = scmp.eq.s32.totalorder %s24, 1
      %p89 = por %p87, %p88
      %p91 = scmp.ne.s32.totalorder %s76, %s90
      %p92 = scmp.eq.s32.totalorder %s24, 0
      %p93 = por %p91, %p92
      %s95 = sadd.s32 %s94, 1
      %p98 = scmp.eq.s32.totalorder %s18, 1
      %p99 = scmp.ne.s32.totalorder %s94, %s96
      %p100 = scmp.eq.s32.totalorder %s18, 0
      %p101 = por %p99, %p100
      %p102 = scmp.ne.s32.totalorder %s94, %s96
      %p103 = scmp.eq.s32.totalorder %s23, 1
      %p104 = por %p102, %p103
      %p105 = scmp.ne.s32.totalorder %s96, %s97
      %p106 = scmp.eq.s32.totalorder %s23, 0
      %p107 = por %p105, %p106
      %p108 = scmp.ne.s32.totalorder %s96, %s97
      %p109 = scmp.eq.s32.totalorder %s24, 1
      %p110 = por %p108, %p109
      %p112 = scmp.ne.s32.totalorder %s97, %s111
      %p113 = scmp.eq.s32.totalorder %s24, 0
      %p114 = por %p112, %p113
      %s116 = sadd.s32 %s115, 1
      %p119 = scmp.eq.s32.totalorder %s18, 1
      %p120 = scmp.ne.s32.totalorder %s115, %s117
      %p121 = scmp.eq.s32.totalorder %s18, 0
      %p122 = por %p120, %p121
      %p123 = scmp.ne.s32.totalorder %s115, %s117
      %p124 = scmp.eq.s32.totalorder %s23, 1
      %p125 = por %p123, %p124
      %p126 = scmp.ne.s32.totalorder %s117, %s118
      %p127 = scmp.eq.s32.totalorder %s23, 0
      %p128 = por %p126, %p127
      %p129 = scmp.ne.s32.totalorder %s117, %s118
      %p130 = scmp.eq.s32.totalorder %s24, 1
      %p131 = por %p129, %p130
      %p133 = scmp.ne.s32.totalorder %s118, %s132
      %p134 = scmp.eq.s32.totalorder %s24, 0
      %p135 = por %p133, %p134
      %s137 = sadd.s32 %s136, 1
      %p140 = scmp.eq.s32.totalorder %s18, 1
      %p141 = scmp.ne.s32.totalorder %s136, %s138
      %p142 = scmp.eq.s32.totalorder %s18, 0
      %p143 = por %p141, %p142
      %p144 = scmp.ne.s32.totalorder %s136, %s138
      %p145 = scmp.eq.s32.totalorder %s23, 1
      %p146 = por %p144, %p145
      %p147 = scmp.ne.s32.totalorder %s138, %s139
      %p148 = scmp.eq.s32.totalorder %s23, 0
      %p149 = por %p147, %p148
      %p150 = scmp.ne.s32.totalorder %s138, %s139
      %p151 = scmp.eq.s32.totalorder %s24, 1
      %p152 = por %p150, %p151
      %p154 = scmp.ne.s32.totalorder %s139, %s153
      %p155 = scmp.eq.s32.totalorder %s24, 0
      %p156 = por %p154, %p155
      %s158 = sadd.s32 %s157, 1
      %p161 = scmp.eq.s32.totalorder %s18, 1
      %p162 = scmp.ne.s32.totalorder %s157, %s159
      %p163 = scmp.eq.s32.totalorder %s18, 0
      %p164 = por %p162, %p163
      %p165 = scmp.ne.s32.totalorder %s157, %s159
      %p166 = scmp.eq.s32.totalorder %s23, 1
      %p167 = por %p165, %p166
      %p168 = scmp.ne.s32.totalorder %s159, %s160
      %p169 = scmp.eq.s32.totalorder %s23, 0
      %p170 = por %p168, %p169
      %p171 = scmp.ne.s32.totalorder %s159, %s160
      %p172 = scmp.eq.s32.totalorder %s24, 1
      %p173 = por %p171, %p172
      %p175 = scmp.ne.s32.totalorder %s160, %s174
      %p176 = scmp.eq.s32.totalorder %s24, 0
      %p177 = por %p175, %p176
      %s178 = ssub.s32 %s18, %s25
      %p179 = scmp.eq.s32.totalorder %s178, 0
      %s181 = sadd.s32 %s180, 1
      %s182 = scalar_select %p179, %s180, %s181
      %p185 = pneg %p179
      %p186 = scmp.eq.s32.totalorder %s18, 1
      %p187 = por %p185, %p186
      %p188 = scmp.ne.s32.totalorder %s180, %s183
      %p189 = scmp.eq.s32.totalorder %s18, 0
      %p190 = por %p188, %p189
      %p191 = scmp.ne.s32.totalorder %s180, %s183
      %p192 = scmp.eq.s32.totalorder %s23, 1
      %p193 = por %p191, %p192
      %p194 = scmp.ne.s32.totalorder %s183, %s184
      %p195 = scmp.eq.s32.totalorder %s23, 0
      %p196 = por %p194, %p195
      %p197 = scmp.ne.s32.totalorder %s183, %s184
      %p198 = scmp.eq.s32.totalorder %s24, 1
      %p199 = por %p197, %p198
      %p201 = scmp.ne.s32.totalorder %s184, %s200
      %p202 = scmp.eq.s32.totalorder %s24, 0
      %p203 = por %p201, %p202
      %p204 = scmp.le.s32.totalorder 1, %s18
      %p205 = scmp.lt.s32.totalorder %s18, 3
      %p206 = pnand %p204, %p205
      %p207 = pneg %p206
      // Predicated region
      $region9: #{tpu_custom_call.1} parent=5 // pred_check
        _
      $region10: #{tpu_custom_call.1} parent=5 // pred_check_branch
        %209 = sbr.rel (%p206) target = $region12
      $region11: #{tpu_custom_call.1} parent=5 // pred_region
        %s210 = ssub.s32 %s18, 1
        // Predicated region
        $region13: #{tpu_custom_call.1} parent=11 // pred_check
          %p211 = pneg %p65
        $region14: #{tpu_custom_call.1} parent=11 // pred_check_branch
          %213 = sbr.rel (%p211) target = $region16
        $region15: #{tpu_custom_call.1} parent=11 // pred_region
          _
        $region16: #{tpu_custom_call.1} parent=11 // pred_fallthru
          _
        // Predicated region
        $region17: #{tpu_custom_call.1} parent=11 // pred_check
          %p214 = pneg %p86
        $region18: #{tpu_custom_call.1} parent=11 // pred_check_branch
          %216 = sbr.rel (%p214) target = $region20
        $region19: #{tpu_custom_call.1} parent=11 // pred_region
          _
        $region20: #{tpu_custom_call.1} parent=11 // pred_fallthru
          _
        // Predicated region
        $region21: #{tpu_custom_call.1} parent=11 // pred_check
          %p217 = pneg %p107
        $region22: #{tpu_custom_call.1} parent=11 // pred_check_branch
          %219 = sbr.rel (%p217) target = $region24
        $region23: #{tpu_custom_call.1} parent=11 // pred_region
          _
        $region24: #{tpu_custom_call.1} parent=11 // pred_fallthru
          _
        // Predicated region
        $region25: #{tpu_custom_call.1} parent=11 // pred_check
          %p220 = pneg %p128
        $region26: #{tpu_custom_call.1} parent=11 // pred_check_branch
          %222 = sbr.rel (%p220) target = $region28
        $region27: #{tpu_custom_call.1} parent=11 // pred_region
          _
        $region28: #{tpu_custom_call.1} parent=11 // pred_fallthru
          _
        // Predicated region
        $region29: #{tpu_custom_call.1} parent=11 // pred_check
          %p223 = pneg %p149
        $region30: #{tpu_custom_call.1} parent=11 // pred_check_branch
          %225 = sbr.rel (%p223) target = $region32
        $region31: #{tpu_custom_call.1} parent=11 // pred_region
          _
        $region32: #{tpu_custom_call.1} parent=11 // pred_fallthru
          _
        // Predicated region
        $region33: #{tpu_custom_call.1} parent=11 // pred_check
          %p226 = pneg %p170
        $region34: #{tpu_custom_call.1} parent=11 // pred_check_branch
          %228 = sbr.rel (%p226) target = $region36
        $region35: #{tpu_custom_call.1} parent=11 // pred_region
          _
        $region36: #{tpu_custom_call.1} parent=11 // pred_fallthru
          _
      $region12: #{tpu_custom_call.1} parent=5 // pred_fallthru
        _
      %p229 = scmp.lt.s32.totalorder %s18, 2
      // Predicated region
      $region37: #{tpu_custom_call.1} parent=5 // pred_check
        %p230 = pneg %p229
      $region38: #{tpu_custom_call.1} parent=5 // pred_check_branch
        %232 = sbr.rel (%p230) target = $region40
      $region39: #{tpu_custom_call.1} parent=5 // pred_region
        // Predicated region
        $region41: #{tpu_custom_call.1} parent=39 // pred_check
          %p233 = pneg %p38
        $region42: #{tpu_custom_call.1} parent=39 // pred_check_branch
          %235 = sbr.rel (%p233) target = $region44
        $region43: #{tpu_custom_call.1} parent=39 // pred_region
          %s236 = smul.u32 2, %s18
          %s237 = ssub.s32 3, %s236
          %p238 = scmp.lt.s32.totalorder %s237, 2
          %s239 = scalar_select %p238, %s237, 2
          %s240 = smul.u32 32, %s239
          %p241 = scmp.lt.s32.totalorder %s236, 2
          %s242 = scalar_select %p241, %s236, 2
          %s243 = smul.addr %s242, 2
          %s244 = scalar_lea.vmem %s0, %s243
          %s245 = smul.u32 2, %s18
          %s246 = ssub.s32 3, %s245
          %p247 = scmp.lt.s32.totalorder %s246, 2
          %s248 = scalar_select %p247, %s246, 2
          %s249 = smul.u32 32, %s248
        $region44: #{tpu_custom_call.1} parent=39 // pred_fallthru
          _
      $region40: #{tpu_custom_call.1} parent=5 // pred_fallthru
        _
      %p250 = scmp.le.s32.totalorder 1, %s18
      %p251 = scmp.lt.s32.totalorder %s18, 3
      %p252 = pnand %p250, %p251
      %p253 = pneg %p252
      // Predicated region
      $region45: #{tpu_custom_call.1} parent=5 // pred_check
        _
      $region46: #{tpu_custom_call.1} parent=5 // pred_check_branch
        %255 = sbr.rel (%p252) target = $region48
      $region47: #{tpu_custom_call.1} parent=5 // pred_region
        %s256 = ssub.s32 %s18, 1
        %s257 = smul.u32 2, %s23
        %s258 = ssub.s32 3, %s257
        %p259 = scmp.lt.s32.totalorder %s258, 2
        %s260 = scalar_select %p259, %s258, 2
        %s261 = smul.u32 32, %s260
        %p262 = scmp.lt.s32.totalorder %s257, 2
        %s263 = scalar_select %p262, %s257, 2
        %s264 = smul.addr %s263, 2
        %s265 = scalar_lea.vmem %s0, %s264
        %p266 = pneg %p44
        %p267 = pneg %p41
        %p268 = pneg %p65
        %p269 = pneg %p62
        %p270 = pneg %p86
        %p271 = pneg %p83
        %p272 = pneg %p107
        %p273 = pneg %p104
        %p274 = pneg %p128
        %p275 = pneg %p125
        %p276 = pneg %p149
        %p277 = pneg %p146
        %p278 = pneg %p170
        %p279 = pneg %p167
        %p280 = pneg %p196
        %p281 = pneg %p193
        %s282 = sand.u32 %s183, 1
        %s283 = scalar_lea.sflag [#allocation4], %s282
        %s284 = sand.u32 %s183, 1
        %s285 = smul.addr %s284, 2
        %s286 = scalar_lea.vmem [#allocation3], %s285
        %s287 = smul.u32 2, %s23
        %s288 = ssub.s32 3, %s287
        %p289 = scmp.lt.s32.totalorder %s288, 2
        %s290 = scalar_select %p289, %s288, 2
        %s291 = smul.u32 32, %s290
        %p292 = scmp.lt.s32.totalorder %s287, 2
        %s293 = scalar_select %p292, %s287, 2
        %s294 = smul.addr %s293, 2
        %s295 = scalar_lea.vmem %s0, %s294
        %s296 = smul.u32 2, %s23
        %s297 = ssub.s32 3, %s296
        %p298 = scmp.lt.s32.totalorder %s297, 2
        %s299 = scalar_select %p298, %s297, 2
        %s300 = smul.u32 32, %s299
        %s301 = smul.u32 2, %s23
        %s302 = ssub.s32 3, %s301
        %p303 = scmp.lt.s32.totalorder %s302, 2
        %s304 = scalar_select %p303, %s302, 2
        %s305 = smul.u32 16, %s304
        %v306 = vld [vmem:[%s295] sm:$0xf]
        %v307 = vld [vmem:[%s1] sm:$0xff]
        %v308 = vld [vmem:[%s1 + $0x8] sm:$0xff]
        %v309 = vld [vmem:[%s1 + $0x10] sm:$0xff]
        %v310 = vld [vmem:[%s1 + $0x18] sm:$0xff]
        %312 = vset.pattern.permute.xlu0 0
        %313 = vperm.xlu0 %312, %v307
        %v314 = vpop.permute.xlu0 %313
        %317 = vset.pattern.permute.xlu0 0
        %318 = vperm.xlu0 %317, %v308
        %v319 = vpop.permute.xlu0 %318
        %322 = vset.pattern.permute.xlu0 0
        %323 = vperm.xlu0 %322, %v309
        %v324 = vpop.permute.xlu0 %323
        %327 = vset.pattern.permute.xlu0 0
        %328 = vperm.xlu0 %327, %v310
        %v329 = vpop.permute.xlu0 %328
        %v332 = vlaneseq
        %v333 = vshrl.u32 %v332, 7
        %v334 = vsub.s32 0, %v333
        %v335 = vrot.slane %v306, %v334
        %v336 = vlaneseq
        %v337 = vshrl.u32 %v336, 7
        %v338 = vsub.s32 2, %v337
        %v339 = vrot.slane %v306, %v338
        %v342 = vlaneseq
        %v343 = vshrl.u32 %v342, 7
        %v344 = vsub.s32 0, %v343
        %v345 = vrot.slane %v335, %v344
        %v346 = vlaneseq
        %v347 = vshrl.u32 %v346, 7
        %v348 = vsub.s32 0, %v347
        %v349 = vrot.slane %v339, %v348
        %v350 = vmul.f32 %v314, %v345
        %v351 = vmul.f32 %v314, %v349
        %v352 = vmul.f32 %v319, %v345
        %v353 = vmul.f32 %v319, %v349
        %v354 = vmul.f32 %v324, %v345
        %v355 = vmul.f32 %v324, %v349
        %v356 = vmul.f32 %v329, %v345
        %v357 = vmul.f32 %v329, %v349
        %358 = vset.pattern.permute.xlu0 1
        %359 = vperm.xlu0 %358, %v307
        %v360 = vpop.permute.xlu0 %359
        %362 = vset.pattern.permute.xlu0 1
        %363 = vperm.xlu0 %362, %v308
        %v364 = vpop.permute.xlu0 %363
        %366 = vset.pattern.permute.xlu0 1
        %367 = vperm.xlu0 %366, %v309
        %v368 = vpop.permute.xlu0 %367
        %370 = vset.pattern.permute.xlu0 1
        %371 = vperm.xlu0 %370, %v310
        %v372 = vpop.permute.xlu0 %371
        %v374 = vlaneseq
        %v375 = vshrl.u32 %v374, 7
        %v376 = vsub.s32 1, %v375
        %v377 = vrot.slane %v306, %v376
        %v378 = vlaneseq
        %v379 = vshrl.u32 %v378, 7
        %v380 = vsub.s32 3, %v379
        %v381 = vrot.slane %v306, %v380
        %v384 = vlaneseq
        %v385 = vshrl.u32 %v384, 7
        %v386 = vsub.s32 1, %v385
        %v387 = vrot.slane %v377, %v386
        %v388 = vlaneseq
        %v389 = vshrl.u32 %v388, 7
        %v390 = vsub.s32 1, %v389
        %v391 = vrot.slane %v381, %v390
        %v392 = vmul.f32 %v360, %v387
        %v393 = vmul.f32 %v360, %v391
        %v394 = vmul.f32 %v364, %v387
        %v395 = vmul.f32 %v364, %v391
        %v396 = vmul.f32 %v368, %v387
        %v397 = vmul.f32 %v368, %v391
        %v398 = vmul.f32 %v372, %v387
        %v399 = vmul.f32 %v372, %v391
        %v400 = vadd.f32 %v350, %v392
        %v401 = vadd.f32 %v351, %v393
        %v402 = vadd.f32 %v352, %v394
        %v403 = vadd.f32 %v353, %v395
        %v404 = vadd.f32 %v354, %v396
        %v405 = vadd.f32 %v355, %v397
        %v406 = vadd.f32 %v356, %v398
        %v407 = vadd.f32 %v357, %v399
        %v408 = vld [vmem:[%s2] sm:$0xff]
        %v409 = vld [vmem:[%s2 + $0x8] sm:$0xff]
        %v410 = vld [vmem:[%s2 + $0x10] sm:$0xff]
        %v411 = vld [vmem:[%s2 + $0x18] sm:$0xff]
        %413 = vset.pattern.permute.xlu0 0
        %414 = vperm.xlu0 %413, %v408
        %v415 = vpop.permute.xlu0 %414
        %418 = vset.pattern.permute.xlu0 0
        %419 = vperm.xlu0 %418, %v409
        %v420 = vpop.permute.xlu0 %419
        %423 = vset.pattern.permute.xlu0 0
        %424 = vperm.xlu0 %423, %v410
        %v425 = vpop.permute.xlu0 %424
        %428 = vset.pattern.permute.xlu0 0
        %429 = vperm.xlu0 %428, %v411
        %v430 = vpop.permute.xlu0 %429
        %v432 = vadd.f32 %v400, %v415
        %v433 = vadd.f32 %v401, %v415
        %v434 = vadd.f32 %v402, %v420
        %v435 = vadd.f32 %v403, %v420
        %v436 = vadd.f32 %v404, %v425
        %v437 = vadd.f32 %v405, %v425
        %v438 = vadd.f32 %v406, %v430
        %v439 = vadd.f32 %v407, %v430
        %v440 = vtanh.pop %v432
        %v441 = vtanh.pop %v433
        %v442 = vtanh.pop %v434
        %v443 = vtanh.pop %v435
        %v444 = vtanh.pop %v436
        %v445 = vtanh.pop %v437
        %v446 = vtanh.pop %v438
        %v447 = vtanh.pop %v439
        %v448 = vld [vmem:[%s3] sm:$0xff]
        %v449 = vld [vmem:[%s3 + $0x8] sm:$0xff]
        %v450 = vld [vmem:[%s3 + $0x10] sm:$0xff]
        %v451 = vld [vmem:[%s3 + $0x18] sm:$0xff]
        %v452 = vld [vmem:[%s4] sm:$0xff]
        %v453 = vld [vmem:[%s4 + $0x8] sm:$0xff]
        %v454 = vld [vmem:[%s4 + $0x10] sm:$0xff]
        %v455 = vld [vmem:[%s4 + $0x18] sm:$0xff]
        %457 = vset.pattern.permute.xlu0 0
        %458 = vperm.xlu0 %457, %v452
        %v459 = vpop.permute.xlu0 %458
        %462 = vset.pattern.permute.xlu0 0
        %463 = vperm.xlu0 %462, %v453
        %v464 = vpop.permute.xlu0 %463
        %467 = vset.pattern.permute.xlu0 0
        %468 = vperm.xlu0 %467, %v454
        %v469 = vpop.permute.xlu0 %468
        %472 = vset.pattern.permute.xlu0 0
        %473 = vperm.xlu0 %472, %v455
        %v474 = vpop.permute.xlu0 %473
        %vm476 = vcmask 261120
        %v478 = vsel %vm476, %v448, 0
        %v481 = vsel %vm476, %v449, 0
        %v484 = vsel %vm476, %v450, 0
        %v487 = vsel %vm476, %v451, 0
        %489 = vmatprep.subr.mxu0 %v441
        %490 = vmatpush1.msra.mxu0 %v440
        %491 = vmatprep.subr.mxu0 %v443
        %492 = vmatpush1.msra.mxu0 %v442
        %493 = vmatprep.subr.mxu0 %v445
        %494 = vmatpush1.msra.mxu0 %v444
        %495 = vmatprep.subr.mxu0 %v447
        %496 = vmatpush1.msra.mxu0 %v446
        %497 = vmatprep.subr.mxu0 0.0
        %498 = vmatpush1.msra.mxu0 0.0
        %499 = vmatprep.subr.mxu0 0.0
        %500 = vmatpush1.msra.mxu0 0.0
        %501 = vmatprep.subr.mxu0 0.0
        %502 = vmatpush1.msra.mxu0 0.0
        %503 = vmatprep.subr.mxu0 0.0
        %504 = vmatpush1.msra.mxu0 0.0
        %505 = vmatprep.subr.mxu0 0.0
        %506 = vmatpush1.msra.mxu0 0.0
        %507 = vmatprep.subr.mxu0 0.0
        %508 = vmatpush1.msra.mxu0 0.0
        %509 = vmatprep.subr.mxu0 0.0
        %510 = vmatpush1.msra.mxu0 0.0
        %511 = vmatprep.subr.mxu0 0.0
        %512 = vmatpush1.msra.mxu0 0.0
        %513 = vmatprep.subr.mxu0 0.0
        %514 = vmatpush1.msra.mxu0 0.0
        %515 = vmatprep.subr.mxu0 0.0
        %516 = vmatpush1.msra.mxu0 0.0
        %517 = vmatprep.subr.mxu0 0.0
        %518 = vmatpush1.msra.mxu0 0.0
        %519 = vmatprep.subr.mxu0 0.0
        %520 = vmatpush1.msra.mxu0 0.0
        %521 = vmatprep.subr.mxu0 0.0
        %522 = vmatpush1.msra.mxu0 0.0
        %523 = vmatprep.subr.mxu0 0.0
        %524 = vmatpush1.msra.mxu0 0.0
        %525 = vmatprep.subr.mxu0 0.0
        %526 = vmatpush1.msra.mxu0 0.0
        %527 = vmatprep.subr.mxu0 0.0
        %528 = vmatpush1.msra.mxu0 0.0
        %529 = vmatprep.subr.mxu0 0.0
        %530 = vmatpush1.msra.mxu0 0.0
        %531 = vmatprep.subr.mxu0 0.0
        %532 = vmatpush1.msra.mxu0 0.0
        %533 = vmatprep.subr.mxu0 0.0
        %534 = vmatpush1.msra.mxu0 0.0
        %535 = vmatprep.subr.mxu0 0.0
        %536 = vmatpush1.msra.mxu0 0.0
        %537 = vmatprep.subr.mxu0 0.0
        %538 = vmatpush1.msra.mxu0 0.0
        %539 = vmatprep.subr.mxu0 0.0
        %540 = vmatpush1.msra.mxu0 0.0
        %541 = vmatprep.subr.mxu0 0.0
        %542 = vmatpush1.msra.mxu0 0.0
        %543 = vmatprep.subr.mxu0 0.0
        %544 = vmatpush1.msra.mxu0 0.0
        %545 = vmatprep.subr.mxu0 0.0
        %546 = vmatpush1.msra.mxu0 0.0
        %547 = vmatprep.subr.mxu0 0.0
        %548 = vmatpush1.msra.mxu0 0.0
        %549 = vmatprep.subr.mxu0 0.0
        %550 = vmatpush1.msra.mxu0 0.0
        %551 = vmatprep.subr.mxu0 0.0
        %552 = vmatpush1.msra.mxu0 0.0
        %553 = vmatprep.mubr.f32.mxu0 0.0
        %554 = vmatmul.mubr.f32.gmra.mrb[0].mxu0 %v478
        %v555 = vpop.f32.mrb[0].mxu0
        %v556 = vadd.f32 %v459, %v555
        %v557 = vpop.f32.mrb[0].mxu0
        %v558 = vadd.f32 %v459, %v557
        %559 = vmatprep.mubr.f32.mxu0 0.0
        %560 = vmatmul.mubr.f32.gmra.mrb[0].mxu0 %v481
        %v561 = vpop.f32.mrb[0].mxu0
        %v562 = vadd.f32 %v464, %v561
        %v563 = vpop.f32.mrb[0].mxu0
        %v564 = vadd.f32 %v464, %v563
        %565 = vmatprep.mubr.f32.mxu0 0.0
        %566 = vmatmul.mubr.f32.gmra.mrb[0].mxu0 %v484
        %v567 = vpop.f32.mrb[0].mxu0
        %v568 = vadd.f32 %v469, %v567
        %v569 = vpop.f32.mrb[0].mxu0
        %v570 = vadd.f32 %v469, %v569
        %571 = vmatprep.mubr.f32.mxu0 0.0
        %572 = vmatmul.mubr.f32.gmra.mrb[0].mxu0 %v487
        %v573 = vpop.f32.mrb[0].mxu0
        %v574 = vadd.f32 %v474, %v573
        %v575 = vpop.f32.mrb[0].mxu0
        %v576 = vadd.f32 %v474, %v575
        %577 = vdwg.mxu0
        %v578 = vtanh.pop %v556
        %v579 = vtanh.pop %v558
        %v580 = vtanh.pop %v562
        %v581 = vtanh.pop %v564
        %v582 = vtanh.pop %v568
        %v583 = vtanh.pop %v570
        %v584 = vtanh.pop %v574
        %v585 = vtanh.pop %v576
        %v586 = vld [vmem:[%s5] sm:$0xff]
        %v587 = vld [vmem:[%s5 + $0x8] sm:$0xff]
        %v588 = vld [vmem:[%s5 + $0x10] sm:$0xff]
        %v589 = vld [vmem:[%s5 + $0x18] sm:$0xff]
        %591 = vset.pattern.permute.xlu0 0
        %592 = vperm.xlu0 %591, %v586
        %v593 = vpop.permute.xlu0 %592
        %596 = vset.pattern.permute.xlu0 0
        %597 = vperm.xlu0 %596, %v587
        %v598 = vpop.permute.xlu0 %597
        %601 = vset.pattern.permute.xlu0 0
        %602 = vperm.xlu0 %601, %v588
        %v603 = vpop.permute.xlu0 %602
        %606 = vset.pattern.permute.xlu0 0
        %607 = vperm.xlu0 %606, %v589
        %v608 = vpop.permute.xlu0 %607
        %v610 = vmul.f32 %v593, %v578
        %v611 = vmul.f32 %v593, %v579
        %v612 = vmul.f32 %v598, %v580
        %v613 = vmul.f32 %v598, %v581
        %v614 = vmul.f32 %v603, %v582
        %v615 = vmul.f32 %v603, %v583
        %v616 = vmul.f32 %v608, %v584
        %v617 = vmul.f32 %v608, %v585
        %v618 = vadd.f32 %v610, %v612
        %v619 = vadd.f32 %v618, %v614
        %v620 = vadd.f32 %v619, %v616
        %v621 = vrot.slane %v620, 4
        %v622 = vadd.f32 %v620, %v621
        %v623 = vrot.slane %v622, 2
        %v624 = vadd.f32 %v622, %v623
        %v625 = vrot.slane %v624, 1
        %v626 = vadd.f32 %v624, %v625
        %v627 = vadd.f32 %v611, %v613
        %v628 = vadd.f32 %v627, %v615
        %v629 = vadd.f32 %v628, %v617
        %v630 = vrot.slane %v629, 4
        %v631 = vadd.f32 %v629, %v630
        %v632 = vrot.slane %v631, 2
        %v633 = vadd.f32 %v631, %v632
        %v634 = vrot.slane %v633, 1
        %v635 = vadd.f32 %v633, %v634
        %v636 = vld [vmem:[#allocation2] sm:$0x1]
        %638 = vset.pattern.permute.xlu0 0
        %639 = vperm.xlu0 %638, %v636
        %v640 = vpop.permute.xlu0 %639
        %v642 = vlaneseq
        %v643 = vshrl.u32 %v642, 7
        %v644 = vsub.s32 0, %v643
        %v645 = vrot.slane %v640, %v644
        %v646 = vadd.f32 %v626, %v645
        %v647 = vadd.f32 %v635, %v645
        %v648 = vmul.f32 %v646, 0.5
        %v649 = vmul.f32 %v647, 0.5
        %v650 = vtanh.pop %v648
        %v651 = vtanh.pop %v649
        %v652 = vadd.f32 %v650, 1.0
        %v653 = vadd.f32 %v651, 1.0
        %v654 = vmul.f32 %v652, 0.5
        %v655 = vmul.f32 %v653, 0.5
        %v658 = vcombine.low %v654, %v655
        %v660 = vunpack.c.l.s4 1966171168
        %v661 = vunpack.c.0.s8 %v660
        %v662 = vlaneseq
        %v663 = vshrl.u32 %v662, 7
        %v664 = vsub.s32 %v661, %v663
        %v665 = vrot.slane %v658, %v664
        %v667 = vunpack.c.l.s4 1966171168
        %v668 = vunpack.c.0.s8 %v667
        %v669 = vlaneseq
        %v670 = vshrl.u32 %v669, 7
        %v671 = vsub.s32 %v668, %v670
        %v672 = vrot.slane %v665, %v671
        %v674 = vlaneseq
        %vm675 = vcmp.ge.s32.totalorder %v674, 0
        %vm676 = vcmp.lt.s32.totalorder %v674, 256
        %vm677 = vmand %vm675, %vm676
        %678 = vst.msk [vmem:[%s286] sm:$0x3] %vm677, %v672
        %s679 = sand.u32 %s183, 1
        %s680 = scalar_lea.sflag [#allocation4], %s679
        %s681 = sand.u32 %s183, 1
        %s682 = smul.addr %s681, 2
        %s683 = scalar_lea.vmem [#allocation3], %s682
        // Predicated region
        $region49: #{tpu_custom_call.1} parent=47 // pred_check
          %p684 = pneg %p193
        $region50: #{tpu_custom_call.1} parent=47 // pred_check_branch
          %686 = sbr.rel (%p684) target = $region52
        $region51: #{tpu_custom_call.1} parent=47 // pred_region
          %s687 = smul.u32 2, %s23
          %s688 = ssub.s32 3, %s687
          %p689 = scmp.lt.s32.totalorder %s688, 2
          %s690 = scalar_select %p689, %s688, 2
          %s691 = smul.u32 16, %s690
          %s693 = ssub.s32 32, %s691
          %694 = vsyncadd %s680, %s693
          %p695 = scmp.ne.s32.totalorder 0, %s691
          %s696 = smul.addr %s687, 16
          %s697 = scalar_lea.hbm %s7, %s696
          %s698 = sshll.u32 %s690, 4
          %s699 = sshll.u32 %s683, 4
          %s700 = int_to_ptr.vmem [resolvable:$true] %s699
          %702 = dma.vmem_to_hbm [thread:$0]  (%p695), %s700, %s698, %s697, %s680
        $region52: #{tpu_custom_call.1} parent=47 // pred_fallthru
          _
      $region48: #{tpu_custom_call.1} parent=5 // pred_fallthru
        _
      %p703 = scmp.le.s32.totalorder 2, %s18
      // Predicated region
      $region53: #{tpu_custom_call.1} parent=5 // pred_check
        %p704 = pneg %p703
      $region54: #{tpu_custom_call.1} parent=5 // pred_check_branch
        %706 = sbr.rel (%p704) target = $region56
      $region55: #{tpu_custom_call.1} parent=5 // pred_region
        %s707 = ssub.s32 %s18, 2
        // Predicated region
        $region57: #{tpu_custom_call.1} parent=55 // pred_check
          %p708 = pneg %p199
        $region58: #{tpu_custom_call.1} parent=55 // pred_check_branch
          %710 = sbr.rel (%p708) target = $region60
        $region59: #{tpu_custom_call.1} parent=55 // pred_region
          %s711 = sand.u32 %s184, 1
          %s712 = scalar_lea.sflag [#allocation4], %s711
          %s713 = sand.u32 %s184, 1
          %s714 = smul.addr %s713, 2
          %s715 = scalar_lea.vmem [#allocation3], %s714
          %716 = dma.done %s712, 32
        $region60: #{tpu_custom_call.1} parent=55 // pred_fallthru
          _
      $region56: #{tpu_custom_call.1} parent=5 // pred_fallthru
        _
    $region6: #{tpu_custom_call.1} parent=1 // loop_footer
      %s22 = sadd.s32 1, %s18
    $region7: #{tpu_custom_call.1} parent=1 // loop_footer_branch
      %17 = sbr.rel target = $region3
    $region8: #{tpu_custom_call.1} parent=1 // loop_exit
      _
    %717 = vsyncpa [#allocation4], 1
    %s718 = scalar_lea.sflag [#allocation4], 1
    %719 = vsyncpa %s718, 1

</llo_original>
